<compile_context>
chip_gen: v7x
topology: tpu7x:2x2x1
jax: 0.10.0
libtpu: 0.0.40
codegen_flags: <defaults>
</compile_context>

<pallas_src>
import jax
import jax.numpy as jnp
from jax import lax
from jax.experimental import pallas as pl
from jax.experimental.pallas import tpu as pltpu

LANES = 128
CHUNK_MAX = 1024     # rows per inner compute chunk: (1024,128) f32 temps = 512 KiB


def _round_up(x, m):
    return (x + m - 1) // m * m


def _chip_config():
    """Per-generation tiling: (row_tile_max, core_slices, core_parallel_sem, vmem_limit)."""
    kind = ""
    try:
        kind = (jax.devices()[0].device_kind or "").lower()
    except Exception:
        pass
    flat = kind.replace(" ", "")
    core_parallel = getattr(pltpu, "CORE_PARALLEL", None)
    if ("v7" in flat or "tpu7" in flat) and core_parallel is not None:
        # v7x: 2 TCs, ~3.2 TB/s HBM -> big tiles + real per-core split.
        # 3 inputs x 2 buffers x (8192,128) f32 = 24 MiB per core.
        return 8192, 2, core_parallel, 48 * 1024 * 1024
    if "v6" in flat:
        # v6e: single TC; 12 MiB double-buffered, well under 32 MiB default.
        return 4096, 1, None, None
    # v5e / older / unknown: stay under the 16 MiB default scoped VMEM.
    return 2048, 1, None, None


def l_intensity(image_A, image_B, image_fused):
    """Pallas implementation of L_Intensity.forward: mean |fused - max(A, B)|."""
    assert image_A.shape == image_B.shape == image_fused.shape
    n_elems = image_A.size

    tm_max, ncs, core_sem, vmem_limit = _chip_config()

    # Flatten to a lane-dense (M, 128) slab in the input's *native* dtype.
    def _to_slab(x):
        flat = x.reshape(-1)
        pad = (-flat.size) % LANES
        if pad:
            # TODO(synk): rare ragged-lane case still pays one jnp.pad copy per
            # input; avoiding it would need a manual-DMA (pl.ANY) tail path.
            flat = jnp.pad(flat, (0, pad))
        return flat.reshape(-1, LANES)

    a2 = _to_slab(image_A)
    b2 = _to_slab(image_B)
    f2 = _to_slab(image_fused)
    M = a2.shape[0]

    # Row tile: as large as the per-chip budget allows, multiple of 8 sublanes,
    # and (when > CHUNK_MAX) a multiple of CHUNK_MAX so the inner loop divides
    # evenly.  Rows past M are masked in-kernel.
    TM = min(tm_max, _round_up(M, 8))
    if TM > CHUNK_MAX:
        TM = _round_up(TM, CHUNK_MAX)
    CHUNK = min(TM, CHUNK_MAX)
    nblocks = pl.cdiv(M, TM)
    if nblocks < 2:
        ncs = 1                      # nothing worth splitting across cores
    tiles_per_slice = pl.cdiv(nblocks, ncs)

    def kernel(a_ref, b_ref, f_ref, out_ref, acc_ref):
        if ncs > 1:
            c = pl.program_id(0)
            i = pl.program_id(1)
            tile_idx = c * tiles_per_slice + i
            last_i = pl.num_programs(1) - 1
        else:
            i = pl.program_id(0)
            tile_idx = i
            last_i = pl.num_programs(0) - 1

        @pl.when(i == 0)
        def _():
            acc_ref[...] = jnp.zeros_like(acc_ref)

        # First logical row of this tile.  Rows >= M are masked off; this also
        # zeroes whole tiles whose block index was clamped past the end.
        base_row = tile_idx * TM
        row_iota = lax.broadcasted_iota(jnp.int32, (CHUNK, LANES), 0)

        # Stream the tile through the VPU in (CHUNK,128) pieces so Mosaic never
        # materializes full-tile f32 temporaries.
        def body(t, carry):
            r0 = pl.multiple_of(t * CHUNK, CHUNK)
            a = a_ref[pl.ds(r0, CHUNK), :].astype(jnp.float32)
            b = b_ref[pl.ds(r0, CHUNK), :].astype(jnp.float32)
            f = f_ref[pl.ds(r0, CHUNK), :].astype(jnp.float32)
            d = jnp.abs(f - jnp.maximum(a, b))
            rows = base_row + r0 + row_iota
            # select (NOT multiply-by-mask): garbage/NaN rows cannot propagate.
            d = jnp.where(rows < M, d, 0.0)
            acc_ref[...] += d.reshape(CHUNK // 8, 8, LANES).sum(axis=0)
            return carry

        lax.fori_loop(0, TM // CHUNK, body, 0)

        @pl.when(i == last_i)
        def _():
            if ncs == 1:
                # Fused final reduce: one XLU cross-lane sum -> (1,1) output.
                out_ref[...] = jnp.sum(acc_ref[...], keepdims=True)
            else:
                # Per-core lane-dense partial; host sums the two tiny blocks.
                out_ref[...] = acc_ref[...].reshape(1, 8, LANES)

    if ncs > 1:
        grid = (ncs, tiles_per_slice)

        def in_map(c, i):
            # Clamp so the DMA never targets a block entirely past the array;
            # clamped duplicates contribute zero via the row mask.
            return (jnp.minimum(c * tiles_per_slice + i, nblocks - 1), 0)

        out_shape = jax.ShapeDtypeStruct((ncs, 8, LANES), jnp.float32)
        out_spec = pl.BlockSpec((1, 8, LANES), lambda c, i: (c, 0, 0))
        dim_sem = (core_sem, "arbitrary")
    else:
        grid = (nblocks,)
        in_map = lambda i: (i, 0)
        out_shape = jax.ShapeDtypeStruct((1, 1), jnp.float32)
        out_spec = pl.BlockSpec((1, 1), lambda i: (0, 0))
        dim_sem = ("arbitrary",)

    tile_spec = pl.BlockSpec((TM, LANES), in_map)

    itemsize = max(jnp.dtype(image_A.dtype).itemsize,
                   jnp.dtype(image_B.dtype).itemsize,
                   jnp.dtype(image_fused.dtype).itemsize)
    cost = pl.CostEstimate(
        flops=4 * n_elems,
        transcendentals=0,
        bytes_accessed=3 * n_elems * itemsize + 4 * 8 * LANES,
    )

    partials = pl.pallas_call(
        kernel,
        out_shape=out_shape,
        grid_spec=pltpu.PrefetchScalarGridSpec(
            num_scalar_prefetch=0,
            grid=grid,
            in_specs=[tile_spec, tile_spec, tile_spec],
            out_specs=out_spec,
            scratch_shapes=[pltpu.VMEM((8, LANES), jnp.float32)],
        ),
        compiler_params=pltpu.CompilerParams(
            dimension_semantics=dim_sem,
            vmem_limit_bytes=vmem_limit,
        ),
        cost_estimate=cost,
    )(a2, b2, f2)

    # Mean over the *original* element count (masked / padded rows contribute 0).
    return partials.sum() / jnp.float32(n_elems)


if __name__ == "__main__":
    key = jax.random.PRNGKey(0)
    k1, k2, k3 = jax.random.split(key, 3)
    shape = (2, 4, 16, 16)  # NCHW
    image_A = jax.random.uniform(k1, shape, dtype=jnp.float32)
    image_B = jax.random.uniform(k2, shape, dtype=jnp.float32)
    image_fused = jax.random.uniform(k3, shape, dtype=jnp.float32)

    loss = l_intensity(image_A, image_B, image_fused)
    loss = jax.block_until_ready(loss)

    # reference check in plain JAX
    ref = jnp.mean(jnp.abs(image_fused - jnp.maximum(image_A, image_B)))
    assert jnp.allclose(loss, ref, rtol=1e-5, atol=1e-6), (loss, ref)

    print("KERNEL_OK")
</pallas_src>

<mosaic_0001>
module attributes {stable_mosaic.version = 11 : i64} {
  func.func @kernel(%arg0: i32, %arg1: memref<16x128xf32, #tpu.memory_space<vmem>>, %arg2: memref<16x128xf32, #tpu.memory_space<vmem>>, %arg3: memref<16x128xf32, #tpu.memory_space<vmem>>, %arg4: memref<1x1xf32, #tpu.memory_space<vmem>>, %arg5: memref<8x128xf32, #tpu.memory_space<vmem>>) attributes {dimension_semantics = [#tpu.dimension_semantics<arbitrary>], iteration_bounds = array<i64: 1>, scalar_prefetch = 0 : i64, scratch_operands = 1 : i64, tpu.core_type = #tpu.core_type<tc>, window_params = [{transform_indices = @transform_0, window_bounds = array<i64: 16, 128>}, {transform_indices = @transform_1, window_bounds = array<i64: 16, 128>}, {transform_indices = @transform_2, window_bounds = array<i64: 16, 128>}, {pipeline_mode = #tpu.pipeline_mode<synchronous>, transform_indices = @transform_3, window_bounds = array<i64: 1, 1>}]} {
    %c0_i32 = arith.constant 0 : i32
    %0 = arith.cmpi eq, %arg0, %c0_i32 : i32
    %1 = arith.extui %0 : i1 to i32
    %c0_i32_0 = arith.constant 0 : i32
    %2 = arith.cmpi ne, %1, %c0_i32_0 : i32
    scf.if %2 {
      %cst_13 = arith.constant 0.000000e+00 : f32
      %31 = vector.broadcast %cst_13 : f32 to vector<8x128xf32>
      %c0_14 = arith.constant 0 : index
      %c0_15 = arith.constant 0 : index
      %32 = vector.load %arg5[%c0_14, %c0_15] : memref<8x128xf32, #tpu.memory_space<vmem>>, vector<8x128xf32>
      tpu.vector_store %arg5[%c0_14, %c0_15], %31 {strides = array<i32>} : memref<8x128xf32, #tpu.memory_space<vmem>>, vector<8x128xf32>,
    } else {
    }
    %c16_i32 = arith.constant 16 : i32
    %3 = arith.muli %arg0, %c16_i32 : i32
    %4 = tpu.iota {dimensions = array<i32: 0>} : vector<16x128xi32>
    %c0_i32_1 = arith.constant 0 : i32
    %c16_i32_2 = arith.constant 16 : i32
    %5 = arith.muli %c0_i32_1, %c16_i32_2 : i32
    %6 = tpu.assume_multiple %5, 16 : i32
    %7 = arith.index_cast %6 : i32 to index
    %c0 = arith.constant 0 : index
    %8 = vector.load %arg1[%7, %c0] : memref<16x128xf32, #tpu.memory_space<vmem>>, vector<16x128xf32>
    %9 = arith.index_cast %6 : i32 to index
    %c0_3 = arith.constant 0 : index
    %10 = vector.load %arg2[%9, %c0_3] : memref<16x128xf32, #tpu.memory_space<vmem>>, vector<16x128xf32>
    %11 = arith.index_cast %6 : i32 to index
    %c0_4 = arith.constant 0 : index
    %12 = vector.load %arg3[%11, %c0_4] : memref<16x128xf32, #tpu.memory_space<vmem>>, vector<16x128xf32>
    %13 = arith.maximumf %8, %10 : vector<16x128xf32>
    %14 = arith.subf %12, %13 : vector<16x128xf32>
    %15 = math.absf %14 : vector<16x128xf32>
    %16 = arith.addi %3, %6 : i32
    %17 = vector.broadcast %16 : i32 to vector<16x128xi32>
    %18 = arith.addi %17, %4 : vector<16x128xi32>
    %c16_i32_5 = arith.constant 16 : i32
    %19 = vector.broadcast %c16_i32_5 : i32 to vector<16x128xi32>
    %20 = arith.cmpi slt, %18, %19 : vector<16x128xi32>
    %cst = arith.constant 0.000000e+00 : f32
    %21 = vector.broadcast %cst : f32 to vector<16x128xf32>
    %22 = arith.select %20, %15, %21 : vector<16x128xi1>, vector<16x128xf32>
    %c0_6 = arith.constant 0 : index
    %c0_7 = arith.constant 0 : index
    %23 = vector.load %arg5[%c0_6, %c0_7] : memref<8x128xf32, #tpu.memory_space<vmem>>, vector<8x128xf32>
    %24 = vector.shape_cast %22 : vector<16x128xf32> to vector<2x8x128xf32>
    %cst_8 = arith.constant dense<0.000000e+00> : vector<8x128xf32>
    %25 = vector.multi_reduction <add>, %24, %cst_8 [0] : vector<2x8x128xf32> to vector<8x128xf32>
    %26 = arith.addf %23, %25 : vector<8x128xf32>
    %c0_9 = arith.constant 0 : index
    %c0_10 = arith.constant 0 : index
    %27 = vector.load %arg5[%c0_9, %c0_10] : memref<8x128xf32, #tpu.memory_space<vmem>>, vector<8x128xf32>
    tpu.vector_store %arg5[%c0_9, %c0_10], %26 {strides = array<i32>} : memref<8x128xf32, #tpu.memory_space<vmem>>, vector<8x128xf32>,
    %c1_i32 = arith.constant 1 : i32
    %c0_i32_11 = arith.constant 0 : i32
    %28 = arith.cmpi eq, %arg0, %c0_i32_11 : i32
    %29 = arith.extui %28 : i1 to i32
    %c0_i32_12 = arith.constant 0 : i32
    %30 = arith.cmpi ne, %29, %c0_i32_12 : i32
    scf.if %30 {
      %c0_13 = arith.constant 0 : index
      %c0_14 = arith.constant 0 : index
      %31 = vector.load %arg5[%c0_13, %c0_14] : memref<8x128xf32, #tpu.memory_space<vmem>>, vector<8x128xf32>
      %32 = vector.shape_cast %31 : vector<8x128xf32> to vector<1x8x128xf32>
      %cst_15 = arith.constant dense<0.000000e+00> : vector<1xf32>
      %33 = vector.multi_reduction <add>, %32, %cst_15 [1, 2] : vector<1x8x128xf32> to vector<1xf32>
      %34 = vector.shape_cast %33 : vector<1xf32> to vector<1x1x1xf32>
      %35 = vector.extract %34[0, 0, 0] : f32 from vector<1x1x1xf32>
      %36 = vector.broadcast %35 : f32 to vector<1x1xf32>
      %c0_16 = arith.constant 0 : index
      %c0_17 = arith.constant 0 : index
      %37 = vector.load %arg4[%c0_16, %c0_17] : memref<1x1xf32, #tpu.memory_space<vmem>>, vector<1x1xf32>
      tpu.vector_store %arg4[%c0_16, %c0_17], %36 {strides = array<i32>} : memref<1x1xf32, #tpu.memory_space<vmem>>, vector<1x1xf32>,
    } else {
    }
    return
  }
  func.func @transform_0(%arg0: i32) -> (i32, i32) {
    %c0_i32 = arith.constant 0 : i32
    %c0_i32_0 = arith.constant 0 : i32
    return %arg0, %c0_i32 : i32, i32
  }
  func.func @transform_1(%arg0: i32) -> (i32, i32) {
    %c0_i32 = arith.constant 0 : i32
    %c0_i32_0 = arith.constant 0 : i32
    return %arg0, %c0_i32 : i32, i32
  }
  func.func @transform_2(%arg0: i32) -> (i32, i32) {
    %c0_i32 = arith.constant 0 : i32
    %c0_i32_0 = arith.constant 0 : i32
    return %arg0, %c0_i32 : i32, i32
  }
  func.func @transform_3(%arg0: i32) -> (i32, i32) {
    %c0_i32 = arith.constant 0 : i32
    %c0_i32_0 = arith.constant 0 : i32
    %c0_i32_1 = arith.constant 0 : i32
    return %c0_i32, %c0_i32_0 : i32, i32
  }
}

</mosaic_0001>

<llo_original>
// kernel: tpu_custom_call.1
$region0: #{tpu_custom_call.1}
  #allocation0 [shape = 'u32[]', space=smem, size = 0x4, offset = 0x4, fixed_abs, tag = 'smem constant byte address 0x4 - core index']
  #allocation1 [shape = 'u32[144,128]{1,0:T(1,128)}', space=vmem, size = 0x12000, scoped, tag = 'internal scratch']
  #allocation2 [shape = 'f32[8,128]{1,0:T(8,128)}', space=vmem, size = 0x1000, scoped, tag = 'scratch operand']
  %s0 = inlined_call_operand.hbm [shape: f32[16,128], index: 0, kind: input, shape index: {}]
  %s1 = inlined_call_operand.hbm [shape: f32[16,128], index: 1, kind: input, shape index: {}]
  %s2 = inlined_call_operand.hbm [shape: f32[16,128], index: 2, kind: input, shape index: {}]
  %s3 = inlined_call_operand.hbm [shape: f32[1,1], index: 3, kind: output, shape index: {}]
  %s4 = sld [smem:[#allocation0]]
  $region42: #{tpu_custom_call.1} parent=0
    _
  %s6 = ssub.s32 1, %s4
  %s7 = scalar_select 0, %s6, %s4
  $region1: #{tpu_custom_call.1} parent=0
    #allocation3 [shape = 'u8[8192]{0}', space=vmem, size = 0x2000, scoped, tag = 'input window, operand 0, single buffered']
    #allocation4 [shape = 's32[1]{0}', space=sflag, size = 0x4, scoped, tag = 'scoped memory for tpu_custom_call.1']
    #allocation5 [shape = 's32[1]{0}', space=sflag, size = 0x4, scoped, tag = 'scoped memory for tpu_custom_call.1']
    #allocation6 [shape = 'u8[8192]{0}', space=vmem, size = 0x2000, scoped, tag = 'input window, operand 1, single buffered']
    #allocation7 [shape = 's32[1]{0}', space=sflag, size = 0x4, scoped, tag = 'scoped memory for tpu_custom_call.1']
    #allocation8 [shape = 'u8[8192]{0}', space=vmem, size = 0x2000, scoped, tag = 'input window, operand 2, single buffered']
    #allocation9 [shape = 'u8[512]{0}', space=vmem, size = 0x400, scoped, tag = 'output window, operand 0, single buffered']
    %8 = vsyncpa [#allocation4], 0
    %9 = vsyncpa [#allocation7], 0
    %10 = vsyncpa [#allocation5], 0
    // Predicated region
    $region2: #{tpu_custom_call.1} parent=1 // pred_check
      _
    $region3: #{tpu_custom_call.1} parent=1 // pred_check_branch
      %12 = sbr.rel (0) target = $region5
    $region4: #{tpu_custom_call.1} parent=1 // pred_region
      %s14 = ssub.s32 256, 256
      %15 = vsyncadd [#allocation4], %s14
      %s16 = sshll.u32 [#allocation3], 4
      %s17 = int_to_ptr.vmem [resolvable:$true] %s16
      %22 = dma.hbm_to_vmem [thread:$0]  %s0, 256, %s17, [#allocation4], 128, 128, 8
    $region5: #{tpu_custom_call.1} parent=1 // pred_fallthru
      _
    // Predicated region
    $region6: #{tpu_custom_call.1} parent=1 // pred_check
      _
    $region7: #{tpu_custom_call.1} parent=1 // pred_check_branch
      %24 = sbr.rel (0) target = $region9
    $region8: #{tpu_custom_call.1} parent=1 // pred_region
      %s26 = ssub.s32 256, 256
      %27 = vsyncadd [#allocation7], %s26
      %s28 = sshll.u32 [#allocation6], 4
      %s29 = int_to_ptr.vmem [resolvable:$true] %s28
      %34 = dma.hbm_to_vmem [thread:$0]  %s1, 256, %s29, [#allocation7], 128, 128, 8
    $region9: #{tpu_custom_call.1} parent=1 // pred_fallthru
      _
    // Predicated region
    $region10: #{tpu_custom_call.1} parent=1 // pred_check
      _
    $region11: #{tpu_custom_call.1} parent=1 // pred_check_branch
      %36 = sbr.rel (0) target = $region13
    $region12: #{tpu_custom_call.1} parent=1 // pred_region
      %s38 = ssub.s32 256, 256
      %39 = vsyncadd [#allocation7], %s38
      %s40 = sshll.u32 [#allocation8], 4
      %s41 = int_to_ptr.vmem [resolvable:$true] %s40
      %46 = dma.hbm_to_vmem [thread:$0]  %s2, 256, %s41, [#allocation7], 128, 128, 8
    $region13: #{tpu_custom_call.1} parent=1 // pred_fallthru
      _
    // Predicated region
    $region14: #{tpu_custom_call.1} parent=1 // pred_check
      _
    $region15: #{tpu_custom_call.1} parent=1 // pred_check_branch
      %48 = sbr.rel (0) target = $region17
    $region16: #{tpu_custom_call.1} parent=1 // pred_region
      %49 = dma.done [#allocation4], 256
    $region17: #{tpu_custom_call.1} parent=1 // pred_fallthru
      _
    // Predicated region
    $region18: #{tpu_custom_call.1} parent=1 // pred_check
      _
    $region19: #{tpu_custom_call.1} parent=1 // pred_check_branch
      %51 = sbr.rel (0) target = $region21
    $region20: #{tpu_custom_call.1} parent=1 // pred_region
      %52 = dma.done [#allocation7], 256
    $region21: #{tpu_custom_call.1} parent=1 // pred_fallthru
      _
    // Predicated region
    $region22: #{tpu_custom_call.1} parent=1 // pred_check
      _
    $region23: #{tpu_custom_call.1} parent=1 // pred_check_branch
      %54 = sbr.rel (0) target = $region25
    $region24: #{tpu_custom_call.1} parent=1 // pred_region
      %55 = dma.done [#allocation7], 256
    $region25: #{tpu_custom_call.1} parent=1 // pred_fallthru
      _
    %p56 = scmp.eq.s32.totalorder 0, 0
    // Predicated region
    $region26: #{tpu_custom_call.1} parent=1 // pred_check
      %p57 = pneg %p56
    $region27: #{tpu_custom_call.1} parent=1 // pred_check_branch
      %59 = sbr.rel (%p57) target = $region29
    $region28: #{tpu_custom_call.1} parent=1 // pred_region
      %60 = vst [vmem:[#allocation2] sm:$0xff] 0.0
    $region29: #{tpu_custom_call.1} parent=1 // pred_fallthru
      _
    %s61 = smul.u32 0, 16
    %v62 = vlaneseq
    %v63 = vshrl.u32 %v62, 7
    %v64 = vadd.s32 %v63, 8
    %v65 = vld [vmem:[#allocation3] sm:$0xff]
    %v66 = vld [vmem:[#allocation3 + $0x8] sm:$0xff]
    %v67 = vld [vmem:[#allocation6] sm:$0xff]
    %v68 = vld [vmem:[#allocation6 + $0x8] sm:$0xff]
    %v69 = vld [vmem:[#allocation8] sm:$0xff]
    %v70 = vld [vmem:[#allocation8 + $0x8] sm:$0xff]
    %v71 = vmax.f32 %v65, %v67
    %v72 = vmax.f32 %v66, %v68
    %v73 = vsub.f32 %v69, %v71
    %v74 = vsub.f32 %v70, %v72
    %v75 = vand.u32 2147483647, %v73
    %v76 = vand.u32 2147483647, %v74
    %s77 = sadd.s32 %s61, 0
    %v78 = vstv %s77
    %v79 = vadd.s32 %v78, %v63
    %v80 = vadd.s32 %v78, %v64
    %vm81 = vcmp.lt.s32.totalorder %v79, 16
    %vm82 = vcmp.lt.s32.totalorder %v80, 16
    %v83 = vsel %vm81, %v75, 0.0
    %v84 = vsel %vm82, %v76, 0.0
    %v85 = vld [vmem:[#allocation2] sm:$0xff]
    %v86 = vadd.f32 %v83, %v84
    %v87 = vadd.f32 %v85, %v86
    %88 = vst [vmem:[#allocation2] sm:$0xff] %v87
    // Predicated region
    $region30: #{tpu_custom_call.1} parent=1 // pred_check
      %p89 = pneg %p56
    $region31: #{tpu_custom_call.1} parent=1 // pred_check_branch
      %91 = sbr.rel (%p89) target = $region33
    $region32: #{tpu_custom_call.1} parent=1 // pred_region
      %v92 = vld [vmem:[#allocation2] sm:$0xff]
      %93 = vadd.xlane.f32.xlu0 %v92
      %v94 = vpop.xlane.xlu0 %93
      %v95 = vrot.slane %v94, 4
      %v96 = vadd.f32 %v94, %v95
      %v97 = vrot.slane %v96, 2
      %v98 = vadd.f32 %v96, %v97
      %v99 = vrot.slane %v98, 1
      %v100 = vadd.f32 %v98, %v99
      %s101 = vtos %v100
      %v102 = vstv %s101
      %vm103 = vcmask 0
      %104 = vst.msk [vmem:[#allocation9] sm:$0x1] %vm103, %v102
    $region33: #{tpu_custom_call.1} parent=1 // pred_fallthru
      _
    // Predicated region
    $region34: #{tpu_custom_call.1} parent=1 // pred_check
      _
    $region35: #{tpu_custom_call.1} parent=1 // pred_check_branch
      %106 = sbr.rel (0) target = $region37
    $region36: #{tpu_custom_call.1} parent=1 // pred_region
      %s108 = ssub.s32 16, 16
      %109 = vsyncadd [#allocation5], %s108
      %s111 = sshll.u32 [#allocation9], 4
      %s112 = int_to_ptr.vmem [resolvable:$true] %s111
      %114 = dma.vmem_to_hbm [thread:$0]  %s112, 16, %s3, [#allocation5]
    $region37: #{tpu_custom_call.1} parent=1 // pred_fallthru
      _
    // Predicated region
    $region38: #{tpu_custom_call.1} parent=1 // pred_check
      _
    $region39: #{tpu_custom_call.1} parent=1 // pred_check_branch
      %116 = sbr.rel (0) target = $region41
    $region40: #{tpu_custom_call.1} parent=1 // pred_region
      %117 = dma.done [#allocation5], 16
    $region41: #{tpu_custom_call.1} parent=1 // pred_fallthru
      _
    %118 = vsyncpa [#allocation4], 1
    %119 = vsyncpa [#allocation7], 1
    %120 = vsyncpa [#allocation5], 1

</llo_original>
